<compile_context>
chip_gen: v7x
topology: tpu7x:2x2x1
jax: 0.10.0
libtpu: 0.0.40
codegen_flags: <defaults>
</compile_context>

<pallas_src>
import jax
import jax.numpy as jnp
from jax.experimental import pallas as pl
from jax.experimental.pallas import tpu as pltpu

HIDDEN = 768     # BERT hidden size (fixed by fc1 = nn.Linear(768, 32))
FC1_OUT = 32
FC2_OUT = 1
TB_MAX = 4096    # max batch-tile rows per grid step (6 MiB bf16, 12 MiB 2-buf)


def classifier_head_kernel(x_ref, w1_ref, b1_ref, w2_ref, b2_ref, o_ref):
    # x_ref : (tb, 768)  bf16  [CLS] hidden-state rows
    # w1_ref: (768, 32)  bf16  fc1 weight (in x out)
    # b1_ref: (1, 32)    f32   fc1 bias
    # w2_ref: (1, 32)    f32   fc2 weight (PyTorch [out, in] layout)
    # b2_ref: (1, 1)     f32   fc2 bias
    # o_ref : (1, tb)    f32   sigmoid outputs, lane-dense

    # fc1 + ReLU: bf16 x bf16 MXU matmul with f32 accumulation.
    h = jnp.dot(x_ref[...], w1_ref[...], preferred_element_type=jnp.float32)
    h = jnp.maximum(h + b1_ref[...], 0.0)                      # (tb, 32) f32

    # fc2 computed as w2 @ h^T so the result lands lane-major: one (1, tb) row
    # -> dense stores and a wide contiguous output DMA.  Operands cast to bf16
    # (native MXU dtype on all generations; avoids the f32 MXU emulation on
    # v5e); accumulation stays f32.
    y = jax.lax.dot_general(
        w2_ref[...].astype(jnp.bfloat16),
        h.astype(jnp.bfloat16),
        dimension_numbers=(((1,), (1,)), ((), ())),            # contract the 32-dim
        preferred_element_type=jnp.float32,
    )                                                          # (1, tb) f32

    # Element-wise epilogue kept in f32 (v5e has no bf16 VPU/EUP).
    o_ref[...] = jax.nn.sigmoid(y + b2_ref[...])


def _pick_batch_tile(batch: int) -> int:
    """<=128 rows: one block (block == full dim, always legal).
    Otherwise: tile is a multiple of 128 (lane-dense output / sublane-aligned
    bf16 input), capped at TB_MAX, sized so the grid has >= 4 steps where
    possible (>= 2 steps per v7x TensorCore keeps both cores busy and lets
    each core's double-buffering actually overlap)."""
    if batch <= 128:
        return batch
    quarter = -(-batch // 4)                     # ceil(batch / 4)
    tb = ((quarter + 127) // 128) * 128          # round up to 128
    return max(128, min(tb, TB_MAX))


def classifier_head(hidden_flat, w1, b1, w2, b2):
    """hidden_flat: [B, S*768] row-major view of the BERT hidden states (bf16).
    Only columns 0:768 (= the [CLS] row of every sequence) are ever read.
    Returns sigmoid probabilities of shape [B, 1] (f32)."""
    B, SH = hidden_flat.shape
    assert SH % HIDDEN == 0 and SH >= HIDDEN
    tb = _pick_batch_tile(B)
    grid = (pl.cdiv(B, tb),)

    # Tiny, purely memory-bound custom call: tell XLA so it schedules it well
    # against the upstream hidden-state producer.
    cost = pl.CostEstimate(
        flops=2 * B * HIDDEN * FC1_OUT + 2 * B * FC1_OUT * FC2_OUT,
        transcendentals=B,                                   # sigmoid exp
        bytes_accessed=(B * HIDDEN * 2                        # bf16 CLS rows
                        + HIDDEN * FC1_OUT * 2                # bf16 w1
                        + (FC1_OUT + FC1_OUT + FC2_OUT) * 4   # f32 b1, w2, b2
                        + B * 4),                             # f32 output
    )

    out = pl.pallas_call(
        classifier_head_kernel,
        out_shape=jax.ShapeDtypeStruct((1, B), jnp.float32),
        grid_spec=pltpu.PrefetchScalarGridSpec(
            num_scalar_prefetch=0,
            grid=grid,
            in_specs=[
                # CLS rows: batch-tiled, lane block pinned to columns 0:768 of
                # the [B, S*768] view -> strided HBM->VMEM copy of exactly the
                # [CLS] hidden states; no wrapper-side [:, 0] slice.
                pl.BlockSpec((tb, HIDDEN), lambda i: (i, 0)),
                # Resident weights / biases: constant index maps (fetched once)
                # and single-buffered — no second pipeline buffer needed for
                # blocks that never change.
                pl.BlockSpec((HIDDEN, FC1_OUT), lambda i: (0, 0),
                             pipeline_mode=pl.Buffered(1)),
                pl.BlockSpec((1, FC1_OUT), lambda i: (0, 0),
                             pipeline_mode=pl.Buffered(1)),
                pl.BlockSpec((FC2_OUT, FC1_OUT), lambda i: (0, 0),
                             pipeline_mode=pl.Buffered(1)),
                pl.BlockSpec((1, FC2_OUT), lambda i: (0, 0),
                             pipeline_mode=pl.Buffered(1)),
            ],
            out_specs=pl.BlockSpec((1, tb), lambda i: (0, i)),
        ),
        compiler_params=pltpu.CompilerParams(
            dimension_semantics=("parallel",),
            # 12 MiB double-buffered x tile at tb=4096 + resident weights:
            # 32 MiB clears v5e's 16 MiB default and fits v7x's 64 MiB VMEM.
            vmem_limit_bytes=32 * 1024 * 1024,
        ),
        cost_estimate=cost,
    )(hidden_flat, w1, b1, w2, b2)
    return out.reshape(B, FC2_OUT)


# -----------------------------------------------------------------------------
# Glue: deterministic stand-in for the pretrained BERT encoder.
# TODO(synk): the pretrained BERT encoder has no clean Pallas equivalent here;
#             replaced by a deterministic embedding stub producing [B, S, 768].
#             (If the stub persisted in production, emitting only the CLS row
#             upstream would dwarf any further in-kernel tuning.)
# -----------------------------------------------------------------------------
def bert_stub(input_ids, attention_mask, embed_table):
    hidden = embed_table[input_ids]                               # [B, S, 768] bf16
    return hidden * attention_mask[..., None].astype(hidden.dtype)


def custom_classifier_forward(input_ids, attention_mask, params):
    hidden = bert_stub(input_ids, attention_mask, params["embed"])  # [B, S, 768]
    B, S, H = hidden.shape
    # Free row-major reshape; the kernel's BlockSpec then reads only the first
    # 768 columns of each row (the [CLS] hidden state).
    hidden_flat = hidden.reshape(B, S * H)
    return classifier_head(hidden_flat, params["w1"], params["b1"],
                           params["w2"], params["b2"])


def reference_forward(input_ids, attention_mask, params):
    cls = bert_stub(input_ids, attention_mask,
                    params["embed"])[:, 0].astype(jnp.float32)     # [B, 768]
    w1 = params["w1"].astype(jnp.float32)
    h = jnp.maximum(cls @ w1 + params["b1"], 0.0)
    return jax.nn.sigmoid(h @ params["w2"].T + params["b2"])       # [B, 1]


if __name__ == "__main__":
    key = jax.random.PRNGKey(0)
    k_emb, k_w1, k_b1, k_w2, k_b2, k_ids_a, k_ids_b = jax.random.split(key, 7)

    S, VOCAB = 16, 64

    params = {
        # bf16 hidden states / fc1 weight halve the dominant HBM read of this
        # memory-bound head; biases and fc2 stay f32.
        "embed": (jax.random.normal(k_emb, (VOCAB, HIDDEN), jnp.float32)
                  * 0.02).astype(jnp.bfloat16),
        # nn.Linear(768, 32): weight [32, 768] -> stored transposed [768, 32]
        "w1": (jax.random.normal(k_w1, (HIDDEN, FC1_OUT), jnp.float32)
               * 0.02).astype(jnp.bfloat16),
        "b1": jax.random.normal(k_b1, (1, FC1_OUT), jnp.float32) * 0.02,
        # nn.Linear(32, 1): weight kept in PyTorch [out, in] = [1, 32] layout
        "w2": jax.random.normal(k_w2, (FC2_OUT, FC1_OUT), jnp.float32) * 0.02,
        "b2": jax.random.normal(k_b2, (1, FC2_OUT), jnp.float32) * 0.02,
    }

    fwd = jax.jit(custom_classifier_forward)

    # Small single-block case and a multi-block case whose last tile is ragged
    # (B=300, tb=128 -> grid=3, last tile 44 rows), both checked against the
    # plain-JAX reference.
    for B, k_ids in ((8, k_ids_a), (300, k_ids_b)):
        input_ids = jax.random.randint(k_ids, (B, S), 0, VOCAB, dtype=jnp.int32)
        attention_mask = jnp.ones((B, S), dtype=jnp.int32)

        out = jax.block_until_ready(fwd(input_ids, attention_mask, params))
        ref = reference_forward(input_ids, attention_mask, params)

        assert out.shape == (B, 1)
        err = jnp.max(jnp.abs(out - ref))
        assert jnp.allclose(out, ref, atol=2e-3, rtol=2e-3), (
            f"mismatch vs reference at B={B}: max abs err {err}")

    print("KERNEL_OK")
</pallas_src>

<mosaic_0001>
module attributes {stable_mosaic.version = 11 : i64} {
  func.func @classifier_head_kernel(%arg0: i32, %arg1: memref<8x768xbf16, #tpu.memory_space<vmem>>, %arg2: memref<768x32xbf16, #tpu.memory_space<vmem>>, %arg3: memref<1x32xf32, #tpu.memory_space<vmem>>, %arg4: memref<1x32xf32, #tpu.memory_space<vmem>>, %arg5: memref<1x1xf32, #tpu.memory_space<vmem>>, %arg6: memref<1x8xf32, #tpu.memory_space<vmem>>) attributes {dimension_semantics = [#tpu.dimension_semantics<parallel>], iteration_bounds = array<i64: 1>, scalar_prefetch = 0 : i64, scratch_operands = 0 : i64, tpu.core_type = #tpu.core_type<tc>, window_params = [{transform_indices = @transform_0, window_bounds = array<i64: 8, 768>}, {pipeline_mode = #tpu.pipeline_mode<synchronous>, transform_indices = @transform_1, window_bounds = array<i64: 768, 32>}, {pipeline_mode = #tpu.pipeline_mode<synchronous>, transform_indices = @transform_2, window_bounds = array<i64: 1, 32>}, {pipeline_mode = #tpu.pipeline_mode<synchronous>, transform_indices = @transform_3, window_bounds = array<i64: 1, 32>}, {pipeline_mode = #tpu.pipeline_mode<synchronous>, transform_indices = @transform_4, window_bounds = array<i64: 1, 1>}, {transform_indices = @transform_5, window_bounds = array<i64: 1, 8>}]} {
    %c0 = arith.constant 0 : index
    %c0_0 = arith.constant 0 : index
    %0 = vector.load %arg1[%c0, %c0_0] : memref<8x768xbf16, #tpu.memory_space<vmem>>, vector<8x768xbf16>
    %c0_1 = arith.constant 0 : index
    %c0_2 = arith.constant 0 : index
    %1 = vector.load %arg2[%c0_1, %c0_2] : memref<768x32xbf16, #tpu.memory_space<vmem>>, vector<768x32xbf16>
    %cst = arith.constant dense<0.000000e+00> : vector<8x32xf32>
    %2 = tpu.matmul %0, %1, %cst {dimension_numbers = #tpu.dot_dimension_numbers<[1], [0], [0], [1], [0, 0, 1, 1], [], []>} : vector<8x768xbf16>, vector<768x32xbf16>, vector<8x32xf32> -> vector<8x32xf32>
    %c0_3 = arith.constant 0 : index
    %c0_4 = arith.constant 0 : index
    %3 = vector.load %arg3[%c0_3, %c0_4] : memref<1x32xf32, #tpu.memory_space<vmem>>, vector<1x32xf32>
    %4 = vector.broadcast %3 : vector<1x32xf32> to vector<8x32xf32>
    %5 = arith.addf %2, %4 : vector<8x32xf32>
    %cst_5 = arith.constant 0.000000e+00 : f32
    %6 = vector.broadcast %cst_5 : f32 to vector<8x32xf32>
    %7 = arith.maximumf %5, %6 : vector<8x32xf32>
    %c0_6 = arith.constant 0 : index
    %c0_7 = arith.constant 0 : index
    %8 = vector.load %arg4[%c0_6, %c0_7] : memref<1x32xf32, #tpu.memory_space<vmem>>, vector<1x32xf32>
    %9 = arith.truncf %8 : vector<1x32xf32> to vector<1x32xbf16>
    %10 = arith.truncf %7 : vector<8x32xf32> to vector<8x32xbf16>
    %cst_8 = arith.constant dense<0.000000e+00> : vector<1x8xf32>
    %11 = tpu.matmul %9, %10, %cst_8 {dimension_numbers = #tpu.dot_dimension_numbers<[1], [1], [0], [0], [0, 0, 1, 0], [], []>} : vector<1x32xbf16>, vector<8x32xbf16>, vector<1x8xf32> -> vector<1x8xf32>
    %c0_9 = arith.constant 0 : index
    %c0_10 = arith.constant 0 : index
    %12 = vector.load %arg5[%c0_9, %c0_10] : memref<1x1xf32, #tpu.memory_space<vmem>>, vector<1x1xf32>
    %13 = vector.broadcast %12 : vector<1x1xf32> to vector<1x8xf32>
    %14 = arith.addf %11, %13 : vector<1x8xf32>
    %15 = arith.negf %14 : vector<1x8xf32>
    %16 = math.exp %15 : vector<1x8xf32>
    %cst_11 = arith.constant 1.000000e+00 : f32
    %17 = vector.broadcast %cst_11 : f32 to vector<1x8xf32>
    %18 = arith.addf %17, %16 : vector<1x8xf32>
    %19 = arith.divf %17, %18 : vector<1x8xf32>
    %c0_12 = arith.constant 0 : index
    %c0_13 = arith.constant 0 : index
    %20 = vector.load %arg6[%c0_12, %c0_13] : memref<1x8xf32, #tpu.memory_space<vmem>>, vector<1x8xf32>
    tpu.vector_store %arg6[%c0_12, %c0_13], %19 {strides = array<i32>} : memref<1x8xf32, #tpu.memory_space<vmem>>, vector<1x8xf32>,
    return
  }
  func.func @transform_0(%arg0: i32) -> (i32, i32) {
    %c0_i32 = arith.constant 0 : i32
    %c0_i32_0 = arith.constant 0 : i32
    return %arg0, %c0_i32 : i32, i32
  }
  func.func @transform_1(%arg0: i32) -> (i32, i32) {
    %c0_i32 = arith.constant 0 : i32
    %c0_i32_0 = arith.constant 0 : i32
    %c0_i32_1 = arith.constant 0 : i32
    return %c0_i32, %c0_i32_0 : i32, i32
  }
  func.func @transform_2(%arg0: i32) -> (i32, i32) {
    %c0_i32 = arith.constant 0 : i32
    %c0_i32_0 = arith.constant 0 : i32
    %c0_i32_1 = arith.constant 0 : i32
    return %c0_i32, %c0_i32_0 : i32, i32
  }
  func.func @transform_3(%arg0: i32) -> (i32, i32) {
    %c0_i32 = arith.constant 0 : i32
    %c0_i32_0 = arith.constant 0 : i32
    %c0_i32_1 = arith.constant 0 : i32
    return %c0_i32, %c0_i32_0 : i32, i32
  }
  func.func @transform_4(%arg0: i32) -> (i32, i32) {
    %c0_i32 = arith.constant 0 : i32
    %c0_i32_0 = arith.constant 0 : i32
    %c0_i32_1 = arith.constant 0 : i32
    return %c0_i32, %c0_i32_0 : i32, i32
  }
  func.func @transform_5(%arg0: i32) -> (i32, i32) {
    %c0_i32 = arith.constant 0 : i32
    %c0_i32_0 = arith.constant 0 : i32
    return %c0_i32, %arg0 : i32, i32
  }
}

</mosaic_0001>

<llo_original>
// kernel: custom_classifier_forward.1
$region0: #{custom_classifier_forward.1}
  #allocation0 [shape = 'u32[]', space=smem, size = 0x4, offset = 0x4, fixed_abs, tag = 'smem constant byte address 0x4 - core index']
  #allocation1 [shape = 'u32[144,128]{1,0:T(1,128)}', space=vmem, size = 0x12000, scoped, tag = 'internal scratch']
  #allocation2 [shape = 'f32[1,1]{1,0:T(1,128)S(1)}', space=vmem, size = 0x200, scoped, tag = 'scoped memory for custom_classifier_forward.1']
  %s0 = inlined_call_operand.vmem [shape: bf16[8,12288], index: 0, kind: input, shape index: {}]
  %s1 = inlined_call_operand.vmem [shape: bf16[768,32], index: 1, kind: input, shape index: {}]
  %s2 = inlined_call_operand.vmem [shape: f32[1,32], index: 2, kind: input, shape index: {}]
  %s3 = inlined_call_operand.vmem [shape: f32[1,32], index: 3, kind: input, shape index: {}]
  %s4 = inlined_call_operand.<no memory space> [shape: f32[1,1], index: 4, kind: input, shape index: {}]
  %s5 = inlined_call_operand.hbm [shape: f32[1,8], index: 5, kind: output, shape index: {}]
  %s6 = sld [smem:[#allocation0]]
  $region30: #{custom_classifier_forward.1} parent=0
    _
  %s8 = ssub.s32 1, %s6
  %s9 = scalar_select 0, %s8, %s6
  %v10 = vstv %s4
  %11 = vst [vmem:[#allocation2] sm:$0x1] %v10
  $region1: #{custom_classifier_forward.1} parent=0
    #allocation3 [shape = 'u8[512]{0}', space=vmem, size = 0x400, scoped, tag = 'output window, operand 0, single buffered']
    #allocation4 [shape = 's32[1]{0}', space=sflag, size = 0x4, scoped, tag = 'scoped memory for custom_classifier_forward.1']
    %12 = vsyncpa [#allocation4], 0
    // Predicated region
    $region2: #{custom_classifier_forward.1} parent=1 // pred_check
      _
    $region3: #{custom_classifier_forward.1} parent=1 // pred_check_branch
      %14 = sbr.rel (0) target = $region5
    $region4: #{custom_classifier_forward.1} parent=1 // pred_region
      _
    $region5: #{custom_classifier_forward.1} parent=1 // pred_fallthru
      _
    // Predicated region
    $region6: #{custom_classifier_forward.1} parent=1 // pred_check
      _
    $region7: #{custom_classifier_forward.1} parent=1 // pred_check_branch
      %16 = sbr.rel (0) target = $region9
    $region8: #{custom_classifier_forward.1} parent=1 // pred_region
      _
    $region9: #{custom_classifier_forward.1} parent=1 // pred_fallthru
      _
    // Predicated region
    $region10: #{custom_classifier_forward.1} parent=1 // pred_check
      _
    $region11: #{custom_classifier_forward.1} parent=1 // pred_check_branch
      %18 = sbr.rel (0) target = $region13
    $region12: #{custom_classifier_forward.1} parent=1 // pred_region
      _
    $region13: #{custom_classifier_forward.1} parent=1 // pred_fallthru
      _
    // Predicated region
    $region14: #{custom_classifier_forward.1} parent=1 // pred_check
      _
    $region15: #{custom_classifier_forward.1} parent=1 // pred_check_branch
      %20 = sbr.rel (0) target = $region17
    $region16: #{custom_classifier_forward.1} parent=1 // pred_region
      _
    $region17: #{custom_classifier_forward.1} parent=1 // pred_fallthru
      _
    // Predicated region
    $region18: #{custom_classifier_forward.1} parent=1 // pred_check
      _
    $region19: #{custom_classifier_forward.1} parent=1 // pred_check_branch
      %22 = sbr.rel (0) target = $region21
    $region20: #{custom_classifier_forward.1} parent=1 // pred_region
      _
    $region21: #{custom_classifier_forward.1} parent=1 // pred_fallthru
      _
    %v24 = vld [vmem:[%s0] sm:$0xff]
    %v25 = vld [vmem:[%s0 + $0x8] sm:$0xff]
    %v26 = vld [vmem:[%s0 + $0x10] sm:$0xff]
    %v27 = vld [vmem:[%s1] sm:$0xf]
    %v28 = vld [vmem:[%s1 + $0x4] sm:$0xf]
    %v29 = vld [vmem:[%s1 + $0x8] sm:$0xf]
    %v30 = vld [vmem:[%s1 + $0xc] sm:$0xf]
    %v31 = vld [vmem:[%s1 + $0x10] sm:$0xf]
    %v32 = vld [vmem:[%s1 + $0x14] sm:$0xf]
    %v33 = vld [vmem:[%s1 + $0x18] sm:$0xf]
    %v34 = vld [vmem:[%s1 + $0x1c] sm:$0xf]
    %v35 = vld [vmem:[%s1 + $0x20] sm:$0xf]
    %v36 = vld [vmem:[%s1 + $0x24] sm:$0xf]
    %v37 = vld [vmem:[%s1 + $0x28] sm:$0xf]
    %v38 = vld [vmem:[%s1 + $0x2c] sm:$0xf]
    %v39 = vld [vmem:[%s1 + $0x30] sm:$0xf]
    %v40 = vld [vmem:[%s1 + $0x34] sm:$0xf]
    %v41 = vld [vmem:[%s1 + $0x38] sm:$0xf]
    %v42 = vld [vmem:[%s1 + $0x3c] sm:$0xf]
    %v43 = vld [vmem:[%s1 + $0x40] sm:$0xf]
    %v44 = vld [vmem:[%s1 + $0x44] sm:$0xf]
    %v45 = vld [vmem:[%s1 + $0x48] sm:$0xf]
    %v46 = vld [vmem:[%s1 + $0x4c] sm:$0xf]
    %v47 = vld [vmem:[%s1 + $0x50] sm:$0xf]
    %v48 = vld [vmem:[%s1 + $0x54] sm:$0xf]
    %v49 = vld [vmem:[%s1 + $0x58] sm:$0xf]
    %v50 = vld [vmem:[%s1 + $0x5c] sm:$0xf]
    %v51 = vld [vmem:[%s1 + $0x60] sm:$0xf]
    %v52 = vld [vmem:[%s1 + $0x64] sm:$0xf]
    %v53 = vld [vmem:[%s1 + $0x68] sm:$0xf]
    %v54 = vld [vmem:[%s1 + $0x6c] sm:$0xf]
    %v55 = vld [vmem:[%s1 + $0x70] sm:$0xf]
    %v56 = vld [vmem:[%s1 + $0x74] sm:$0xf]
    %v57 = vld [vmem:[%s1 + $0x78] sm:$0xf]
    %v58 = vld [vmem:[%s1 + $0x7c] sm:$0xf]
    %v59 = vld [vmem:[%s1 + $0x80] sm:$0xf]
    %v60 = vld [vmem:[%s1 + $0x84] sm:$0xf]
    %v61 = vld [vmem:[%s1 + $0x88] sm:$0xf]
    %v62 = vld [vmem:[%s1 + $0x8c] sm:$0xf]
    %v63 = vld [vmem:[%s1 + $0x90] sm:$0xf]
    %v64 = vld [vmem:[%s1 + $0x94] sm:$0xf]
    %v65 = vld [vmem:[%s1 + $0x98] sm:$0xf]
    %v66 = vld [vmem:[%s1 + $0x9c] sm:$0xf]
    %v67 = vld [vmem:[%s1 + $0xa0] sm:$0xf]
    %v68 = vld [vmem:[%s1 + $0xa4] sm:$0xf]
    %v69 = vld [vmem:[%s1 + $0xa8] sm:$0xf]
    %v70 = vld [vmem:[%s1 + $0xac] sm:$0xf]
    %v71 = vld [vmem:[%s1 + $0xb0] sm:$0xf]
    %v72 = vld [vmem:[%s1 + $0xb4] sm:$0xf]
    %v73 = vld [vmem:[%s1 + $0xb8] sm:$0xf]
    %v74 = vld [vmem:[%s1 + $0xbc] sm:$0xf]
    %v75 = vld [vmem:[%s1 + $0xc0] sm:$0xf]
    %v76 = vld [vmem:[%s1 + $0xc4] sm:$0xf]
    %v77 = vld [vmem:[%s1 + $0xc8] sm:$0xf]
    %v78 = vld [vmem:[%s1 + $0xcc] sm:$0xf]
    %v79 = vld [vmem:[%s1 + $0xd0] sm:$0xf]
    %v80 = vld [vmem:[%s1 + $0xd4] sm:$0xf]
    %v81 = vld [vmem:[%s1 + $0xd8] sm:$0xf]
    %v82 = vld [vmem:[%s1 + $0xdc] sm:$0xf]
    %v83 = vld [vmem:[%s1 + $0xe0] sm:$0xf]
    %v84 = vld [vmem:[%s1 + $0xe4] sm:$0xf]
    %v85 = vld [vmem:[%s1 + $0xe8] sm:$0xf]
    %v86 = vld [vmem:[%s1 + $0xec] sm:$0xf]
    %v87 = vld [vmem:[%s1 + $0xf0] sm:$0xf]
    %v88 = vld [vmem:[%s1 + $0xf4] sm:$0xf]
    %v89 = vld [vmem:[%s1 + $0xf8] sm:$0xf]
    %v90 = vld [vmem:[%s1 + $0xfc] sm:$0xf]
    %v91 = vld [vmem:[%s1 + $0x100] sm:$0xf]
    %v92 = vld [vmem:[%s1 + $0x104] sm:$0xf]
    %v93 = vld [vmem:[%s1 + $0x108] sm:$0xf]
    %v94 = vld [vmem:[%s1 + $0x10c] sm:$0xf]
    %v95 = vld [vmem:[%s1 + $0x110] sm:$0xf]
    %v96 = vld [vmem:[%s1 + $0x114] sm:$0xf]
    %v97 = vld [vmem:[%s1 + $0x118] sm:$0xf]
    %v98 = vld [vmem:[%s1 + $0x11c] sm:$0xf]
    %v99 = vld [vmem:[%s1 + $0x120] sm:$0xf]
    %v100 = vld [vmem:[%s1 + $0x124] sm:$0xf]
    %v101 = vld [vmem:[%s1 + $0x128] sm:$0xf]
    %v102 = vld [vmem:[%s1 + $0x12c] sm:$0xf]
    %v103 = vld [vmem:[%s1 + $0x130] sm:$0xf]
    %v104 = vld [vmem:[%s1 + $0x134] sm:$0xf]
    %v105 = vld [vmem:[%s1 + $0x138] sm:$0xf]
    %v106 = vld [vmem:[%s1 + $0x13c] sm:$0xf]
    %v107 = vld [vmem:[%s1 + $0x140] sm:$0xf]
    %v108 = vld [vmem:[%s1 + $0x144] sm:$0xf]
    %v109 = vld [vmem:[%s1 + $0x148] sm:$0xf]
    %v110 = vld [vmem:[%s1 + $0x14c] sm:$0xf]
    %v111 = vld [vmem:[%s1 + $0x150] sm:$0xf]
    %v112 = vld [vmem:[%s1 + $0x154] sm:$0xf]
    %v113 = vld [vmem:[%s1 + $0x158] sm:$0xf]
    %v114 = vld [vmem:[%s1 + $0x15c] sm:$0xf]
    %v115 = vld [vmem:[%s1 + $0x160] sm:$0xf]
    %v116 = vld [vmem:[%s1 + $0x164] sm:$0xf]
    %v117 = vld [vmem:[%s1 + $0x168] sm:$0xf]
    %v118 = vld [vmem:[%s1 + $0x16c] sm:$0xf]
    %v119 = vld [vmem:[%s1 + $0x170] sm:$0xf]
    %v120 = vld [vmem:[%s1 + $0x174] sm:$0xf]
    %v121 = vld [vmem:[%s1 + $0x178] sm:$0xf]
    %v122 = vld [vmem:[%s1 + $0x17c] sm:$0xf]
    %v123 = vld [vmem:[%s2] sm:$0x1]
    %v125 = vlaneseq
    %v126 = vshrl.u32 %v125, 7
    %v127 = vsub.s32 0, %v126
    %v128 = vrot.slane %v123, %v127
    %v133 = vunpack.c.l.b16 %v24
    %v134 = vunpack.c.h.b16 %v24
    %v135 = vunpack.c.l.b16 %v25
    %v136 = vunpack.c.h.b16 %v25
    %v137 = vunpack.c.l.b16 %v26
    %v138 = vunpack.c.h.b16 %v26
    %v139 = vpack.c.b16 %v133, %v133
    %v140 = vpack.c.b16 %v134, %v134
    %v141 = vpack.c.b16 %v135, %v135
    %v142 = vpack.c.b16 %v136, %v136
    %v143 = vpack.c.b16 %v137, %v137
    %v144 = vpack.c.b16 %v138, %v138
    %v247 = vunpack.c.l.b16 %v27
    %v248 = vunpack.c.l.b16 %v28
    %v249 = vunpack.c.l.b16 %v29
    %v250 = vunpack.c.l.b16 %v30
    %v251 = vunpack.c.l.b16 %v31
    %v252 = vunpack.c.l.b16 %v32
    %v253 = vunpack.c.l.b16 %v33
    %v254 = vunpack.c.l.b16 %v34
    %v255 = vunpack.c.l.b16 %v35
    %v256 = vunpack.c.l.b16 %v36
    %v257 = vunpack.c.l.b16 %v37
    %v258 = vunpack.c.l.b16 %v38
    %v259 = vunpack.c.l.b16 %v39
    %v260 = vunpack.c.l.b16 %v40
    %v261 = vunpack.c.l.b16 %v41
    %v262 = vunpack.c.l.b16 %v42
    %v263 = vunpack.c.l.b16 %v43
    %v264 = vunpack.c.l.b16 %v44
    %v265 = vunpack.c.l.b16 %v45
    %v266 = vunpack.c.l.b16 %v46
    %v267 = vunpack.c.l.b16 %v47
    %v268 = vunpack.c.l.b16 %v48
    %v269 = vunpack.c.l.b16 %v49
    %v270 = vunpack.c.l.b16 %v50
    %v271 = vunpack.c.l.b16 %v51
    %v272 = vunpack.c.l.b16 %v52
    %v273 = vunpack.c.l.b16 %v53
    %v274 = vunpack.c.l.b16 %v54
    %v275 = vunpack.c.l.b16 %v55
    %v276 = vunpack.c.l.b16 %v56
    %v277 = vunpack.c.l.b16 %v57
    %v278 = vunpack.c.l.b16 %v58
    %v279 = vunpack.c.l.b16 %v59
    %v280 = vunpack.c.l.b16 %v60
    %v281 = vunpack.c.l.b16 %v61
    %v282 = vunpack.c.l.b16 %v62
    %v283 = vunpack.c.l.b16 %v63
    %v284 = vunpack.c.l.b16 %v64
    %v285 = vunpack.c.l.b16 %v65
    %v286 = vunpack.c.l.b16 %v66
    %v287 = vunpack.c.l.b16 %v67
    %v288 = vunpack.c.l.b16 %v68
    %v289 = vunpack.c.l.b16 %v69
    %v290 = vunpack.c.l.b16 %v70
    %v291 = vunpack.c.l.b16 %v71
    %v292 = vunpack.c.l.b16 %v72
    %v293 = vunpack.c.l.b16 %v73
    %v294 = vunpack.c.l.b16 %v74
    %v295 = vunpack.c.l.b16 %v75
    %v296 = vunpack.c.l.b16 %v76
    %v297 = vunpack.c.l.b16 %v77
    %v298 = vunpack.c.l.b16 %v78
    %v299 = vunpack.c.l.b16 %v79
    %v300 = vunpack.c.l.b16 %v80
    %v301 = vunpack.c.l.b16 %v81
    %v302 = vunpack.c.l.b16 %v82
    %v303 = vunpack.c.l.b16 %v83
    %v304 = vunpack.c.l.b16 %v84
    %v305 = vunpack.c.l.b16 %v85
    %v306 = vunpack.c.l.b16 %v86
    %v307 = vunpack.c.l.b16 %v87
    %v308 = vunpack.c.l.b16 %v88
    %v309 = vunpack.c.l.b16 %v89
    %v310 = vunpack.c.l.b16 %v90
    %v311 = vunpack.c.l.b16 %v91
    %v312 = vunpack.c.l.b16 %v92
    %v313 = vunpack.c.l.b16 %v93
    %v314 = vunpack.c.l.b16 %v94
    %v315 = vunpack.c.l.b16 %v95
    %v316 = vunpack.c.l.b16 %v96
    %v317 = vunpack.c.l.b16 %v97
    %v318 = vunpack.c.l.b16 %v98
    %v319 = vunpack.c.l.b16 %v99
    %v320 = vunpack.c.l.b16 %v100
    %v321 = vunpack.c.l.b16 %v101
    %v322 = vunpack.c.l.b16 %v102
    %v323 = vunpack.c.l.b16 %v103
    %v324 = vunpack.c.l.b16 %v104
    %v325 = vunpack.c.l.b16 %v105
    %v326 = vunpack.c.l.b16 %v106
    %v327 = vunpack.c.l.b16 %v107
    %v328 = vunpack.c.l.b16 %v108
    %v329 = vunpack.c.l.b16 %v109
    %v330 = vunpack.c.l.b16 %v110
    %v331 = vunpack.c.l.b16 %v111
    %v332 = vunpack.c.l.b16 %v112
    %v333 = vunpack.c.l.b16 %v113
    %v334 = vunpack.c.l.b16 %v114
    %v335 = vunpack.c.l.b16 %v115
    %v336 = vunpack.c.l.b16 %v116
    %v337 = vunpack.c.l.b16 %v117
    %v338 = vunpack.c.l.b16 %v118
    %v339 = vunpack.c.l.b16 %v119
    %v340 = vunpack.c.l.b16 %v120
    %v341 = vunpack.c.l.b16 %v121
    %v342 = vunpack.c.l.b16 %v122
    %v343 = vpack.c.b16 %v248, %v247
    %v344 = vpack.c.b16 %v250, %v249
    %v345 = vpack.c.b16 %v252, %v251
    %v346 = vpack.c.b16 %v254, %v253
    %v347 = vpack.c.b16 %v256, %v255
    %v348 = vpack.c.b16 %v258, %v257
    %v349 = vpack.c.b16 %v260, %v259
    %v350 = vpack.c.b16 %v262, %v261
    %v351 = vpack.c.b16 %v264, %v263
    %v352 = vpack.c.b16 %v266, %v265
    %v353 = vpack.c.b16 %v268, %v267
    %v354 = vpack.c.b16 %v270, %v269
    %v355 = vpack.c.b16 %v272, %v271
    %v356 = vpack.c.b16 %v274, %v273
    %v357 = vpack.c.b16 %v276, %v275
    %v358 = vpack.c.b16 %v278, %v277
    %v359 = vpack.c.b16 %v280, %v279
    %v360 = vpack.c.b16 %v282, %v281
    %v361 = vpack.c.b16 %v284, %v283
    %v362 = vpack.c.b16 %v286, %v285
    %v363 = vpack.c.b16 %v288, %v287
    %v364 = vpack.c.b16 %v290, %v289
    %v365 = vpack.c.b16 %v292, %v291
    %v366 = vpack.c.b16 %v294, %v293
    %v367 = vpack.c.b16 %v296, %v295
    %v368 = vpack.c.b16 %v298, %v297
    %v369 = vpack.c.b16 %v300, %v299
    %v370 = vpack.c.b16 %v302, %v301
    %v371 = vpack.c.b16 %v304, %v303
    %v372 = vpack.c.b16 %v306, %v305
    %v373 = vpack.c.b16 %v308, %v307
    %v374 = vpack.c.b16 %v310, %v309
    %v375 = vpack.c.b16 %v312, %v311
    %v376 = vpack.c.b16 %v314, %v313
    %v377 = vpack.c.b16 %v316, %v315
    %v378 = vpack.c.b16 %v318, %v317
    %v379 = vpack.c.b16 %v320, %v319
    %v380 = vpack.c.b16 %v322, %v321
    %v381 = vpack.c.b16 %v324, %v323
    %v382 = vpack.c.b16 %v326, %v325
    %v383 = vpack.c.b16 %v328, %v327
    %v384 = vpack.c.b16 %v330, %v329
    %v385 = vpack.c.b16 %v332, %v331
    %v386 = vpack.c.b16 %v334, %v333
    %v387 = vpack.c.b16 %v336, %v335
    %v388 = vpack.c.b16 %v338, %v337
    %v389 = vpack.c.b16 %v340, %v339
    %v390 = vpack.c.b16 %v342, %v341
    %439 = vmatprep.subr.bf16.mxu0 0
    %440 = vmatpush1.bf16.msra.mxu0 %v343
    %441 = vmatprep.subr.bf16.mxu0 0
    %442 = vmatpush1.bf16.msra.mxu0 %v344
    %443 = vmatprep.subr.bf16.mxu0 0
    %444 = vmatpush1.bf16.msra.mxu0 %v345
    %445 = vmatprep.subr.bf16.mxu0 0
    %446 = vmatpush1.bf16.msra.mxu0 %v346
    %447 = vmatprep.subr.bf16.mxu0 0
    %448 = vmatpush1.bf16.msra.mxu0 %v347
    %449 = vmatprep.subr.bf16.mxu0 0
    %450 = vmatpush1.bf16.msra.mxu0 %v348
    %451 = vmatprep.subr.bf16.mxu0 0
    %452 = vmatpush1.bf16.msra.mxu0 %v349
    %453 = vmatprep.subr.bf16.mxu0 0
    %454 = vmatpush1.bf16.msra.mxu0 %v350
    %455 = vmatprep.subr.bf16.mxu0 0
    %456 = vmatpush1.bf16.msra.mxu0 %v351
    %457 = vmatprep.subr.bf16.mxu0 0
    %458 = vmatpush1.bf16.msra.mxu0 %v352
    %459 = vmatprep.subr.bf16.mxu0 0
    %460 = vmatpush1.bf16.msra.mxu0 %v353
    %461 = vmatprep.subr.bf16.mxu0 0
    %462 = vmatpush1.bf16.msra.mxu0 %v354
    %463 = vmatprep.subr.bf16.mxu0 0
    %464 = vmatpush1.bf16.msra.mxu0 %v355
    %465 = vmatprep.subr.bf16.mxu0 0
    %466 = vmatpush1.bf16.msra.mxu0 %v356
    %467 = vmatprep.subr.bf16.mxu0 0
    %468 = vmatpush1.bf16.msra.mxu0 %v357
    %469 = vmatprep.subr.bf16.mxu0 0
    %470 = vmatpush1.bf16.msra.mxu0 %v358
    %471 = vmatprep.mubr.bf16.mxu0 %v140
    %472 = vmatmul.mubr.bf16.gmra.mrb[0].mxu0 %v139
    %v473 = vpop.f32.mrb[0].mxu0
    %v474 = vadd.f32 %v128, %v473
    %v475 = vpop.f32.mrb[0].mxu0
    %v476 = vpop.f32.mrb[0].mxu0
    %v477 = vpop.f32.mrb[0].mxu0
    %478 = vdwg.mxu0
    %479 = vmatprep.subr.bf16.mxu0 0
    %480 = vmatpush1.bf16.msra.mxu0 %v359
    %481 = vmatprep.subr.bf16.mxu0 0
    %482 = vmatpush1.bf16.msra.mxu0 %v360
    %483 = vmatprep.subr.bf16.mxu0 0
    %484 = vmatpush1.bf16.msra.mxu0 %v361
    %485 = vmatprep.subr.bf16.mxu0 0
    %486 = vmatpush1.bf16.msra.mxu0 %v362
    %487 = vmatprep.subr.bf16.mxu0 0
    %488 = vmatpush1.bf16.msra.mxu0 %v363
    %489 = vmatprep.subr.bf16.mxu0 0
    %490 = vmatpush1.bf16.msra.mxu0 %v364
    %491 = vmatprep.subr.bf16.mxu0 0
    %492 = vmatpush1.bf16.msra.mxu0 %v365
    %493 = vmatprep.subr.bf16.mxu0 0
    %494 = vmatpush1.bf16.msra.mxu0 %v366
    %495 = vmatprep.subr.bf16.mxu0 0
    %496 = vmatpush1.bf16.msra.mxu0 %v367
    %497 = vmatprep.subr.bf16.mxu0 0
    %498 = vmatpush1.bf16.msra.mxu0 %v368
    %499 = vmatprep.subr.bf16.mxu0 0
    %500 = vmatpush1.bf16.msra.mxu0 %v369
    %501 = vmatprep.subr.bf16.mxu0 0
    %502 = vmatpush1.bf16.msra.mxu0 %v370
    %503 = vmatprep.subr.bf16.mxu0 0
    %504 = vmatpush1.bf16.msra.mxu0 %v371
    %505 = vmatprep.subr.bf16.mxu0 0
    %506 = vmatpush1.bf16.msra.mxu0 %v372
    %507 = vmatprep.subr.bf16.mxu0 0
    %508 = vmatpush1.bf16.msra.mxu0 %v373
    %509 = vmatprep.subr.bf16.mxu0 0
    %510 = vmatpush1.bf16.msra.mxu0 %v374
    %511 = vmatprep.mubr.bf16.mxu0 %v142
    %512 = vmatmul.mubr.bf16.gmra.mrb[0].mxu0 %v141
    %v513 = vpop.f32.mrb[0].mxu0
    %v514 = vadd.f32 %v474, %v513
    %v515 = vpop.f32.mrb[0].mxu0
    %v516 = vpop.f32.mrb[0].mxu0
    %v517 = vpop.f32.mrb[0].mxu0
    %518 = vdwg.mxu0
    %519 = vmatprep.subr.bf16.mxu0 0
    %520 = vmatpush1.bf16.msra.mxu0 %v375
    %521 = vmatprep.subr.bf16.mxu0 0
    %522 = vmatpush1.bf16.msra.mxu0 %v376
    %523 = vmatprep.subr.bf16.mxu0 0
    %524 = vmatpush1.bf16.msra.mxu0 %v377
    %525 = vmatprep.subr.bf16.mxu0 0
    %526 = vmatpush1.bf16.msra.mxu0 %v378
    %527 = vmatprep.subr.bf16.mxu0 0
    %528 = vmatpush1.bf16.msra.mxu0 %v379
    %529 = vmatprep.subr.bf16.mxu0 0
    %530 = vmatpush1.bf16.msra.mxu0 %v380
    %531 = vmatprep.subr.bf16.mxu0 0
    %532 = vmatpush1.bf16.msra.mxu0 %v381
    %533 = vmatprep.subr.bf16.mxu0 0
    %534 = vmatpush1.bf16.msra.mxu0 %v382
    %535 = vmatprep.subr.bf16.mxu0 0
    %536 = vmatpush1.bf16.msra.mxu0 %v383
    %537 = vmatprep.subr.bf16.mxu0 0
    %538 = vmatpush1.bf16.msra.mxu0 %v384
    %539 = vmatprep.subr.bf16.mxu0 0
    %540 = vmatpush1.bf16.msra.mxu0 %v385
    %541 = vmatprep.subr.bf16.mxu0 0
    %542 = vmatpush1.bf16.msra.mxu0 %v386
    %543 = vmatprep.subr.bf16.mxu0 0
    %544 = vmatpush1.bf16.msra.mxu0 %v387
    %545 = vmatprep.subr.bf16.mxu0 0
    %546 = vmatpush1.bf16.msra.mxu0 %v388
    %547 = vmatprep.subr.bf16.mxu0 0
    %548 = vmatpush1.bf16.msra.mxu0 %v389
    %549 = vmatprep.subr.bf16.mxu0 0
    %550 = vmatpush1.bf16.msra.mxu0 %v390
    %551 = vmatprep.mubr.bf16.mxu0 %v144
    %552 = vmatmul.mubr.bf16.gmra.mrb[0].mxu0 %v143
    %v553 = vpop.f32.mrb[0].mxu0
    %v554 = vadd.f32 %v514, %v553
    %v555 = vpop.f32.mrb[0].mxu0
    %v556 = vpop.f32.mrb[0].mxu0
    %v557 = vpop.f32.mrb[0].mxu0
    %558 = vdwg.mxu0
    %v559 = vmax.f32 %v554, 0.0
    %v560 = vld [vmem:[%s3] sm:$0x1]
    %v561 = vpack.c.bf16 %v560, %v560
    %v562 = vpack.c.bf16 %v559, %v559
    %v563 = vld [vmem:[#allocation2] sm:$0x1]
    %565 = vset.pattern.permute.xlu0 0
    %566 = vperm.xlu0 %565, %v563
    %v567 = vpop.permute.xlu0 %566
    %v569 = vlaneseq
    %v570 = vshrl.u32 %v569, 7
    %v571 = vsub.s32 0, %v570
    %v572 = vrot.slane %v567, %v571
    %vm573 = vcmask 261120
    %v575 = vsel %vm573, %v561, 0
    %v578 = vsel %vm573, %v562, 0
    %580 = vmatprep.subr.bf16.mxu0 0
    %581 = vmatpush1.bf16.xpose.msra.mxu0 %v578
    %582 = vmatprep.subr.bf16.mxu0 0
    %583 = vmatpush1.bf16.xpose.msra.mxu0 0
    %584 = vmatprep.subr.bf16.mxu0 0
    %585 = vmatpush1.bf16.xpose.msra.mxu0 0
    %586 = vmatprep.subr.bf16.mxu0 0
    %587 = vmatpush1.bf16.xpose.msra.mxu0 0
    %588 = vmatprep.subr.bf16.mxu0 0
    %589 = vmatpush1.bf16.xpose.msra.mxu0 0
    %590 = vmatprep.subr.bf16.mxu0 0
    %591 = vmatpush1.bf16.xpose.msra.mxu0 0
    %592 = vmatprep.subr.bf16.mxu0 0
    %593 = vmatpush1.bf16.xpose.msra.mxu0 0
    %594 = vmatprep.subr.bf16.mxu0 0
    %595 = vmatpush1.bf16.xpose.msra.mxu0 0
    %596 = vmatprep.subr.bf16.mxu0 0
    %597 = vmatpush1.bf16.xpose.msra.mxu0 0
    %598 = vmatprep.subr.bf16.mxu0 0
    %599 = vmatpush1.bf16.xpose.msra.mxu0 0
    %600 = vmatprep.subr.bf16.mxu0 0
    %601 = vmatpush1.bf16.xpose.msra.mxu0 0
    %602 = vmatprep.subr.bf16.mxu0 0
    %603 = vmatpush1.bf16.xpose.msra.mxu0 0
    %604 = vmatprep.subr.bf16.mxu0 0
    %605 = vmatpush1.bf16.xpose.msra.mxu0 0
    %606 = vmatprep.subr.bf16.mxu0 0
    %607 = vmatpush1.bf16.xpose.msra.mxu0 0
    %608 = vmatprep.subr.bf16.mxu0 0
    %609 = vmatpush1.bf16.xpose.msra.mxu0 0
    %610 = vmatprep.subr.bf16.mxu0 0
    %611 = vmatpush1.bf16.xpose.msra.mxu0 0
    %612 = vmatprep.mubr.bf16.mxu0 0
    %613 = vmatmul.mubr.bf16.gmra.mrb[0].mxu0 %v575
    %v614 = vpop.f32.mrb[0].mxu0
    %v615 = vadd.f32 %v572, %v614
    %v616 = vpop.f32.mrb[0].mxu0
    %v617 = vpop.f32.mrb[0].mxu0
    %v618 = vpop.f32.mrb[0].mxu0
    %619 = vdwg.mxu0
    %v620 = vxor.u32 %v615, 2147483648
    %v621 = vmul.f32 %v620, 1.442695
    %v622 = vpow.pop %v621
    %v623 = vadd.f32 %v622, 1.0
    %v624 = vrcp.pop %v623
    %v625 = vmul.f32 1.0, %v624
    %vm626 = vcmask 57344
    %627 = vst.msk [vmem:[#allocation3] sm:$0x1] %vm626, %v625
    // Predicated region
    $region22: #{custom_classifier_forward.1} parent=1 // pred_check
      _
    $region23: #{custom_classifier_forward.1} parent=1 // pred_check_branch
      %629 = sbr.rel (0) target = $region25
    $region24: #{custom_classifier_forward.1} parent=1 // pred_region
      %s631 = ssub.s32 16, 16
      %632 = vsyncadd [#allocation4], %s631
      %s634 = sshll.u32 [#allocation3], 4
      %s635 = int_to_ptr.vmem [resolvable:$true] %s634
      %637 = dma.vmem_to_hbm [thread:$0]  %s635, 16, %s5, [#allocation4]
    $region25: #{custom_classifier_forward.1} parent=1 // pred_fallthru
      _
    // Predicated region
    $region26: #{custom_classifier_forward.1} parent=1 // pred_check
      _
    $region27: #{custom_classifier_forward.1} parent=1 // pred_check_branch
      %639 = sbr.rel (0) target = $region29
    $region28: #{custom_classifier_forward.1} parent=1 // pred_region
      %640 = dma.done [#allocation4], 16
    $region29: #{custom_classifier_forward.1} parent=1 // pred_fallthru
      _
    %641 = vsyncpa [#allocation4], 1

</llo_original>
